<compile_context>
chip_gen: v7x
topology: tpu7x:2x2x1
jax: 0.10.0
libtpu: 0.0.40
codegen_flags: <defaults>
</compile_context>

<pallas_src>
import jax
import jax.numpy as jnp
from jax.experimental import pallas as pl
from jax.experimental.pallas import tpu as pltpu

EPS = 1e-5
NEG_SLOPE = 0.01  # nn.LeakyReLU default


def _leaky_relu(v):
    return jnp.where(v >= 0, v, NEG_SLOPE * v)


def _batchnorm_train(y, gamma, beta):
    # Training-mode BatchNorm1d: biased batch statistics over the batch axis.
    # Fused-reduction form: E[y] and E[y^2] are independent reductions.
    mean = jnp.mean(y, axis=0, keepdims=True)
    meansq = jnp.mean(y * y, axis=0, keepdims=True)
    var = meansq - mean * mean
    inv = jax.lax.rsqrt(var + EPS)
    return (y - mean) * inv * gamma + beta


def linear_block_kernel(x_ref, w_ref, p_ref, o_ref):
    x = x_ref[...]                 # (B, F)
    w = w_ref[...]                 # (2, F, F)  -- each already (in, out)
    p = p_ref[...]                 # (6, F)     -- [b1, g1, be1, b2, g2, be2]

    w1, w2 = w[0], w[1]
    b1, g1, be1 = p[0:1], p[1:2], p[2:3]
    b2, g2, be2 = p[3:4], p[4:5], p[5:6]

    # ---- layer 1: Linear -> BatchNorm1d -> LeakyReLU -------------------
    y = jnp.dot(x, w1, preferred_element_type=jnp.float32) + b1
    y = _batchnorm_train(y, g1, be1)
    y = _leaky_relu(y)

    # ---- layer 2: Linear -> BatchNorm1d -> LeakyReLU -------------------
    y = jnp.dot(y.astype(x.dtype), w2, preferred_element_type=jnp.float32) + b2
    y = _batchnorm_train(y, g2, be2)
    y = _leaky_relu(y)

    o_ref[...] = y.astype(o_ref.dtype)


def pack_params(w1, b1, g1, be1, w2, b2, g2, be2):
    """One-time (cold-path) packing of the static parameters.

    w1, w2 : (F, F) Linear weights already transposed to (in, out).
    Remaining args are (F,) or (1, F) per-feature vectors.
    Returns (w_stack, p_stack) to be reused across calls.
    """
    w_stack = jnp.stack([w1, w2], axis=0)                       # (2, F, F)
    vecs = [jnp.reshape(v, (-1,)) for v in (b1, g1, be1, b2, g2, be2)]
    p_stack = jnp.stack(vecs, axis=0)                           # (6, F)
    return w_stack, p_stack


@jax.jit
def linear_block(x, w_stack, p_stack):
    B, F = x.shape
    vmem = pl.BlockSpec(memory_space=pltpu.MemorySpace.VMEM)
    return pl.pallas_call(
        linear_block_kernel,
        out_shape=jax.ShapeDtypeStruct((B, F), x.dtype),
        in_specs=[vmem, vmem, vmem],
        out_specs=vmem,
    )(x, w_stack, p_stack)


def reference(x, w1, b1, g1, be1, w2, b2, g2, be2):
    def bn(y, g, b):
        m = y.mean(0, keepdims=True)
        v = ((y - m) ** 2).mean(0, keepdims=True)
        return (y - m) * jax.lax.rsqrt(v + EPS) * g + b

    y = x @ w1 + b1
    y = bn(y, g1, be1)
    y = jnp.where(y >= 0, y, NEG_SLOPE * y)
    y = y @ w2 + b2
    y = bn(y, g2, be2)
    y = jnp.where(y >= 0, y, NEG_SLOPE * y)
    return y


if __name__ == "__main__":
    B, F = 16, 32  # linear_size = 32

    key = jax.random.PRNGKey(0)
    ks = jax.random.split(key, 5)
    x = jax.random.normal(ks[0], (B, F), dtype=jnp.float32)

    # Deterministic parameter init (Kaiming-uniform-ish scale for Linear layers).
    bound = 1.0 / jnp.sqrt(F)
    # Linear weights stored already transposed to (in, out) so the kernel does x @ W.
    w1 = jax.random.uniform(ks[1], (F, F), minval=-bound, maxval=bound, dtype=jnp.float32)
    b1 = jax.random.uniform(ks[2], (1, F), minval=-bound, maxval=bound, dtype=jnp.float32)
    w2 = jax.random.uniform(ks[3], (F, F), minval=-bound, maxval=bound, dtype=jnp.float32)
    b2 = jax.random.uniform(ks[4], (1, F), minval=-bound, maxval=bound, dtype=jnp.float32)
    # BatchNorm affine params (PyTorch init: gamma=1, beta=0).
    g1 = jnp.ones((1, F), jnp.float32)
    be1 = jnp.zeros((1, F), jnp.float32)
    g2 = jnp.ones((1, F), jnp.float32)
    be2 = jnp.zeros((1, F), jnp.float32)

    # Cold path: pack static parameters once; hot path reuses the packed slabs.
    w_stack, p_stack = pack_params(w1, b1, g1, be1, w2, b2, g2, be2)

    out = linear_block(x, w_stack, p_stack)
    out = jax.block_until_ready(out)

    ref = reference(x, w1, b1, g1, be1, w2, b2, g2, be2)
    assert out.shape == (B, F)
    assert jnp.allclose(out, ref, atol=1e-4, rtol=1e-4), "mismatch vs JAX reference"

    print("KERNEL_OK")
</pallas_src>

<mosaic_0001>
module attributes {stable_mosaic.version = 11 : i64} {
  func.func @linear_block_kernel(%arg0: memref<16x32xf32, #tpu.memory_space<vmem>>, %arg1: memref<2x32x32xf32, #tpu.memory_space<vmem>>, %arg2: memref<6x32xf32, #tpu.memory_space<vmem>>, %arg3: memref<16x32xf32, #tpu.memory_space<vmem>>) attributes {dimension_semantics = [], scalar_prefetch = 0 : i64, scratch_operands = 0 : i64, tpu.core_type = #tpu.core_type<tc>} {
    %c0 = arith.constant 0 : index
    %c0_0 = arith.constant 0 : index
    %0 = vector.load %arg0[%c0, %c0_0] : memref<16x32xf32, #tpu.memory_space<vmem>>, vector<16x32xf32>
    %c0_1 = arith.constant 0 : index
    %c0_2 = arith.constant 0 : index
    %c0_3 = arith.constant 0 : index
    %1 = vector.load %arg1[%c0_1, %c0_2, %c0_3] : memref<2x32x32xf32, #tpu.memory_space<vmem>>, vector<2x32x32xf32>
    %c0_4 = arith.constant 0 : index
    %c0_5 = arith.constant 0 : index
    %2 = vector.load %arg2[%c0_4, %c0_5] : memref<6x32xf32, #tpu.memory_space<vmem>>, vector<6x32xf32>
    %3 = vector.extract_strided_slice %1 {offsets = [0, 0, 0], sizes = [1, 32, 32], strides = [1, 1, 1]} : vector<2x32x32xf32> to vector<1x32x32xf32>
    %4 = vector.shape_cast %3 : vector<1x32x32xf32> to vector<32x32xf32>
    %5 = vector.extract_strided_slice %1 {offsets = [1, 0, 0], sizes = [1, 32, 32], strides = [1, 1, 1]} : vector<2x32x32xf32> to vector<1x32x32xf32>
    %6 = vector.shape_cast %5 : vector<1x32x32xf32> to vector<32x32xf32>
    %7 = vector.extract_strided_slice %2 {offsets = [0, 0], sizes = [1, 32], strides = [1, 1]} : vector<6x32xf32> to vector<1x32xf32>
    %8 = vector.extract_strided_slice %2 {offsets = [1, 0], sizes = [1, 32], strides = [1, 1]} : vector<6x32xf32> to vector<1x32xf32>
    %9 = vector.extract_strided_slice %2 {offsets = [2, 0], sizes = [1, 32], strides = [1, 1]} : vector<6x32xf32> to vector<1x32xf32>
    %10 = vector.extract_strided_slice %2 {offsets = [3, 0], sizes = [1, 32], strides = [1, 1]} : vector<6x32xf32> to vector<1x32xf32>
    %11 = vector.extract_strided_slice %2 {offsets = [4, 0], sizes = [1, 32], strides = [1, 1]} : vector<6x32xf32> to vector<1x32xf32>
    %12 = vector.extract_strided_slice %2 {offsets = [5, 0], sizes = [1, 32], strides = [1, 1]} : vector<6x32xf32> to vector<1x32xf32>
    %cst = arith.constant dense<0.000000e+00> : vector<16x32xf32>
    %13 = tpu.matmul %0, %4, %cst {dimension_numbers = #tpu.dot_dimension_numbers<[1], [0], [0], [1], [0, 0, 1, 1], [], []>} : vector<16x32xf32>, vector<32x32xf32>, vector<16x32xf32> -> vector<16x32xf32>
    %14 = vector.broadcast %7 : vector<1x32xf32> to vector<16x32xf32>
    %15 = arith.addf %13, %14 : vector<16x32xf32>
    %cst_6 = arith.constant dense<0.000000e+00> : vector<32xf32>
    %16 = vector.multi_reduction <add>, %15, %cst_6 [0] : vector<16x32xf32> to vector<32xf32>
    %17 = vector.shape_cast %16 : vector<32xf32> to vector<1x32xf32>
    %cst_7 = arith.constant 1.600000e+01 : f32
    %18 = vector.broadcast %cst_7 : f32 to vector<1x32xf32>
    %19 = arith.divf %17, %18 : vector<1x32xf32>
    %20 = arith.mulf %15, %15 : vector<16x32xf32>
    %cst_8 = arith.constant dense<0.000000e+00> : vector<32xf32>
    %21 = vector.multi_reduction <add>, %20, %cst_8 [0] : vector<16x32xf32> to vector<32xf32>
    %22 = vector.shape_cast %21 : vector<32xf32> to vector<1x32xf32>
    %cst_9 = arith.constant 1.600000e+01 : f32
    %23 = vector.broadcast %cst_9 : f32 to vector<1x32xf32>
    %24 = arith.divf %22, %23 : vector<1x32xf32>
    %25 = arith.mulf %19, %19 : vector<1x32xf32>
    %26 = arith.subf %24, %25 : vector<1x32xf32>
    %cst_10 = arith.constant 9.99999974E-6 : f32
    %27 = vector.broadcast %cst_10 : f32 to vector<1x32xf32>
    %28 = arith.addf %26, %27 : vector<1x32xf32>
    %29 = math.rsqrt %28 : vector<1x32xf32>
    %30 = vector.broadcast %19 : vector<1x32xf32> to vector<16x32xf32>
    %31 = arith.subf %15, %30 : vector<16x32xf32>
    %32 = vector.broadcast %29 : vector<1x32xf32> to vector<16x32xf32>
    %33 = arith.mulf %31, %32 : vector<16x32xf32>
    %34 = vector.broadcast %8 : vector<1x32xf32> to vector<16x32xf32>
    %35 = arith.mulf %33, %34 : vector<16x32xf32>
    %36 = vector.broadcast %9 : vector<1x32xf32> to vector<16x32xf32>
    %37 = arith.addf %35, %36 : vector<16x32xf32>
    %cst_11 = arith.constant 0.000000e+00 : f32
    %38 = vector.broadcast %cst_11 : f32 to vector<16x32xf32>
    %39 = arith.cmpf oge, %37, %38 : vector<16x32xf32>
    %cst_12 = arith.constant 0.00999999977 : f32
    %40 = vector.broadcast %cst_12 : f32 to vector<16x32xf32>
    %41 = arith.mulf %40, %37 : vector<16x32xf32>
    %42 = arith.select %39, %37, %41 : vector<16x32xi1>, vector<16x32xf32>
    %cst_13 = arith.constant dense<0.000000e+00> : vector<16x32xf32>
    %43 = tpu.matmul %42, %6, %cst_13 {dimension_numbers = #tpu.dot_dimension_numbers<[1], [0], [0], [1], [0, 0, 1, 1], [], []>} : vector<16x32xf32>, vector<32x32xf32>, vector<16x32xf32> -> vector<16x32xf32>
    %44 = vector.broadcast %10 : vector<1x32xf32> to vector<16x32xf32>
    %45 = arith.addf %43, %44 : vector<16x32xf32>
    %cst_14 = arith.constant dense<0.000000e+00> : vector<32xf32>
    %46 = vector.multi_reduction <add>, %45, %cst_14 [0] : vector<16x32xf32> to vector<32xf32>
    %47 = vector.shape_cast %46 : vector<32xf32> to vector<1x32xf32>
    %cst_15 = arith.constant 1.600000e+01 : f32
    %48 = vector.broadcast %cst_15 : f32 to vector<1x32xf32>
    %49 = arith.divf %47, %48 : vector<1x32xf32>
    %50 = arith.mulf %45, %45 : vector<16x32xf32>
    %cst_16 = arith.constant dense<0.000000e+00> : vector<32xf32>
    %51 = vector.multi_reduction <add>, %50, %cst_16 [0] : vector<16x32xf32> to vector<32xf32>
    %52 = vector.shape_cast %51 : vector<32xf32> to vector<1x32xf32>
    %cst_17 = arith.constant 1.600000e+01 : f32
    %53 = vector.broadcast %cst_17 : f32 to vector<1x32xf32>
    %54 = arith.divf %52, %53 : vector<1x32xf32>
    %55 = arith.mulf %49, %49 : vector<1x32xf32>
    %56 = arith.subf %54, %55 : vector<1x32xf32>
    %cst_18 = arith.constant 9.99999974E-6 : f32
    %57 = vector.broadcast %cst_18 : f32 to vector<1x32xf32>
    %58 = arith.addf %56, %57 : vector<1x32xf32>
    %59 = math.rsqrt %58 : vector<1x32xf32>
    %60 = vector.broadcast %49 : vector<1x32xf32> to vector<16x32xf32>
    %61 = arith.subf %45, %60 : vector<16x32xf32>
    %62 = vector.broadcast %59 : vector<1x32xf32> to vector<16x32xf32>
    %63 = arith.mulf %61, %62 : vector<16x32xf32>
    %64 = vector.broadcast %11 : vector<1x32xf32> to vector<16x32xf32>
    %65 = arith.mulf %63, %64 : vector<16x32xf32>
    %66 = vector.broadcast %12 : vector<1x32xf32> to vector<16x32xf32>
    %67 = arith.addf %65, %66 : vector<16x32xf32>
    %cst_19 = arith.constant 0.000000e+00 : f32
    %68 = vector.broadcast %cst_19 : f32 to vector<16x32xf32>
    %69 = arith.cmpf oge, %67, %68 : vector<16x32xf32>
    %cst_20 = arith.constant 0.00999999977 : f32
    %70 = vector.broadcast %cst_20 : f32 to vector<16x32xf32>
    %71 = arith.mulf %70, %67 : vector<16x32xf32>
    %72 = arith.select %69, %67, %71 : vector<16x32xi1>, vector<16x32xf32>
    %c0_21 = arith.constant 0 : index
    %c0_22 = arith.constant 0 : index
    %73 = vector.load %arg3[%c0_21, %c0_22] : memref<16x32xf32, #tpu.memory_space<vmem>>, vector<16x32xf32>
    tpu.vector_store %arg3[%c0_21, %c0_22], %72 {strides = array<i32>} : memref<16x32xf32, #tpu.memory_space<vmem>>, vector<16x32xf32>,
    return
  }
}

</mosaic_0001>

<llo_original>
// kernel: linear_block.1
$region0: #{linear_block.1}
  #allocation0 [shape = 'u32[]', space=smem, size = 0x4, offset = 0x4, fixed_abs, tag = 'smem constant byte address 0x4 - core index']
  #allocation1 [shape = 'u32[144,128]{1,0:T(1,128)}', space=vmem, size = 0x12000, scoped, tag = 'internal scratch']
  %s0 = inlined_call_operand.hbm [shape: f32[16,32], index: 0, kind: input, shape index: {}]
  %s1 = inlined_call_operand.hbm [shape: f32[2,32,32], index: 1, kind: input, shape index: {}]
  %s2 = inlined_call_operand.hbm [shape: f32[6,32], index: 2, kind: input, shape index: {}]
  %s3 = inlined_call_operand.hbm [shape: f32[16,32], index: 3, kind: output, shape index: {}]
  %s4 = sld [smem:[#allocation0]]
  $region34: #{linear_block.1} parent=0
    _
  %s6 = ssub.s32 1, %s4
  %s7 = scalar_select 0, %s6, %s4
  $region1: #{linear_block.1} parent=0
    #allocation2 [shape = 'u8[8192]{0}', space=vmem, size = 0x2000, scoped, tag = 'input window, operand 0, single buffered']
    #allocation3 [shape = 's32[1]{0}', space=sflag, size = 0x4, scoped, tag = 'scoped memory for linear_block.1']
    #allocation4 [shape = 's32[1]{0}', space=sflag, size = 0x4, scoped, tag = 'scoped memory for linear_block.1']
    #allocation5 [shape = 'u8[32768]{0}', space=vmem, size = 0x8000, scoped, tag = 'input window, operand 1, single buffered']
    #allocation6 [shape = 's32[1]{0}', space=sflag, size = 0x4, scoped, tag = 'scoped memory for linear_block.1']
    #allocation7 [shape = 'u8[4096]{0}', space=vmem, size = 0x1000, scoped, tag = 'input window, operand 2, single buffered']
    #allocation8 [shape = 'u8[8192]{0}', space=vmem, size = 0x2000, scoped, tag = 'output window, operand 0, single buffered']
    %8 = vsyncpa [#allocation3], 0
    %9 = vsyncpa [#allocation6], 0
    %10 = vsyncpa [#allocation4], 0
    // Predicated region
    $region2: #{linear_block.1} parent=1 // pred_check
      _
    $region3: #{linear_block.1} parent=1 // pred_check_branch
      %12 = sbr.rel (0) target = $region5
    $region4: #{linear_block.1} parent=1 // pred_region
      %s14 = ssub.s32 256, 256
      %15 = vsyncadd [#allocation3], %s14
      %s16 = sshll.u32 [#allocation2], 4
      %s17 = int_to_ptr.vmem [resolvable:$true] %s16
      %22 = dma.hbm_to_vmem [thread:$0]  %s0, 256, %s17, [#allocation3], 128, 128, 8
    $region5: #{linear_block.1} parent=1 // pred_fallthru
      _
    // Predicated region
    $region6: #{linear_block.1} parent=1 // pred_check
      _
    $region7: #{linear_block.1} parent=1 // pred_check_branch
      %24 = sbr.rel (0) target = $region9
    $region8: #{linear_block.1} parent=1 // pred_region
      %s26 = ssub.s32 1024, 1024
      %27 = vsyncadd [#allocation6], %s26
      %s28 = sshll.u32 [#allocation5], 4
      %s29 = int_to_ptr.vmem [resolvable:$true] %s28
      %34 = dma.hbm_to_vmem [thread:$0]  %s1, 1024, %s29, [#allocation6], 128, 128, 8
    $region9: #{linear_block.1} parent=1 // pred_fallthru
      _
    // Predicated region
    $region10: #{linear_block.1} parent=1 // pred_check
      _
    $region11: #{linear_block.1} parent=1 // pred_check_branch
      %36 = sbr.rel (0) target = $region13
    $region12: #{linear_block.1} parent=1 // pred_region
      %s38 = ssub.s32 128, 128
      %39 = vsyncadd [#allocation6], %s38
      %s41 = sshll.u32 [#allocation7], 4
      %s42 = int_to_ptr.vmem [resolvable:$true] %s41
      %44 = dma.hbm_to_vmem [thread:$0]  %s2, 128, %s42, [#allocation6]
    $region13: #{linear_block.1} parent=1 // pred_fallthru
      _
    // Predicated region
    $region14: #{linear_block.1} parent=1 // pred_check
      _
    $region15: #{linear_block.1} parent=1 // pred_check_branch
      %46 = sbr.rel (0) target = $region17
    $region16: #{linear_block.1} parent=1 // pred_region
      %47 = dma.done [#allocation3], 256
    $region17: #{linear_block.1} parent=1 // pred_fallthru
      _
    // Predicated region
    $region18: #{linear_block.1} parent=1 // pred_check
      _
    $region19: #{linear_block.1} parent=1 // pred_check_branch
      %49 = sbr.rel (0) target = $region21
    $region20: #{linear_block.1} parent=1 // pred_region
      %50 = dma.done [#allocation6], 1024
    $region21: #{linear_block.1} parent=1 // pred_fallthru
      _
    // Predicated region
    $region22: #{linear_block.1} parent=1 // pred_check
      _
    $region23: #{linear_block.1} parent=1 // pred_check_branch
      %52 = sbr.rel (0) target = $region25
    $region24: #{linear_block.1} parent=1 // pred_region
      %53 = dma.done [#allocation6], 128
    $region25: #{linear_block.1} parent=1 // pred_fallthru
      _
    %v54 = vld [vmem:[#allocation2] sm:$0xff]
    %v55 = vld [vmem:[#allocation2 + $0x8] sm:$0xff]
    %v56 = vld [vmem:[#allocation5] sm:$0xff]
    %v57 = vld [vmem:[#allocation5 + $0x8] sm:$0xff]
    %v58 = vld [vmem:[#allocation5 + $0x10] sm:$0xff]
    %v59 = vld [vmem:[#allocation5 + $0x18] sm:$0xff]
    %v60 = vld [vmem:[#allocation5 + $0x20] sm:$0xff]
    %v61 = vld [vmem:[#allocation5 + $0x28] sm:$0xff]
    %v62 = vld [vmem:[#allocation5 + $0x30] sm:$0xff]
    %v63 = vld [vmem:[#allocation5 + $0x38] sm:$0xff]
    %v64 = vld [vmem:[#allocation7] sm:$0x3f]
    %v65 = vlaneseq
    %v66 = vshrl.u32 %v65, 7
    %v67 = vsub.s32 0, %v66
    %v68 = vrot.slane %v64, %v67
    %vm69 = vcmask 261120
    %v71 = vsel %vm69, %v54, 0
    %v74 = vsel %vm69, %v55, 0
    %76 = vmatprep.subr.mxu0 0.0
    %77 = vmatpush1.msra.mxu0 %v56
    %78 = vmatprep.subr.mxu0 0.0
    %79 = vmatpush1.msra.mxu0 %v57
    %80 = vmatprep.subr.mxu0 0.0
    %81 = vmatpush1.msra.mxu0 %v58
    %82 = vmatprep.subr.mxu0 0.0
    %83 = vmatpush1.msra.mxu0 %v59
    %84 = vmatprep.subr.mxu0 0.0
    %85 = vmatpush1.msra.mxu0 0.0
    %86 = vmatprep.subr.mxu0 0.0
    %87 = vmatpush1.msra.mxu0 0.0
    %88 = vmatprep.subr.mxu0 0.0
    %89 = vmatpush1.msra.mxu0 0.0
    %90 = vmatprep.subr.mxu0 0.0
    %91 = vmatpush1.msra.mxu0 0.0
    %92 = vmatprep.subr.mxu0 0.0
    %93 = vmatpush1.msra.mxu0 0.0
    %94 = vmatprep.subr.mxu0 0.0
    %95 = vmatpush1.msra.mxu0 0.0
    %96 = vmatprep.subr.mxu0 0.0
    %97 = vmatpush1.msra.mxu0 0.0
    %98 = vmatprep.subr.mxu0 0.0
    %99 = vmatpush1.msra.mxu0 0.0
    %100 = vmatprep.subr.mxu0 0.0
    %101 = vmatpush1.msra.mxu0 0.0
    %102 = vmatprep.subr.mxu0 0.0
    %103 = vmatpush1.msra.mxu0 0.0
    %104 = vmatprep.subr.mxu0 0.0
    %105 = vmatpush1.msra.mxu0 0.0
    %106 = vmatprep.subr.mxu0 0.0
    %107 = vmatpush1.msra.mxu0 0.0
    %108 = vmatprep.subr.mxu0 0.0
    %109 = vmatpush1.msra.mxu0 0.0
    %110 = vmatprep.subr.mxu0 0.0
    %111 = vmatpush1.msra.mxu0 0.0
    %112 = vmatprep.subr.mxu0 0.0
    %113 = vmatpush1.msra.mxu0 0.0
    %114 = vmatprep.subr.mxu0 0.0
    %115 = vmatpush1.msra.mxu0 0.0
    %116 = vmatprep.subr.mxu0 0.0
    %117 = vmatpush1.msra.mxu0 0.0
    %118 = vmatprep.subr.mxu0 0.0
    %119 = vmatpush1.msra.mxu0 0.0
    %120 = vmatprep.subr.mxu0 0.0
    %121 = vmatpush1.msra.mxu0 0.0
    %122 = vmatprep.subr.mxu0 0.0
    %123 = vmatpush1.msra.mxu0 0.0
    %124 = vmatprep.subr.mxu0 0.0
    %125 = vmatpush1.msra.mxu0 0.0
    %126 = vmatprep.subr.mxu0 0.0
    %127 = vmatpush1.msra.mxu0 0.0
    %128 = vmatprep.subr.mxu0 0.0
    %129 = vmatpush1.msra.mxu0 0.0
    %130 = vmatprep.subr.mxu0 0.0
    %131 = vmatpush1.msra.mxu0 0.0
    %132 = vmatprep.subr.mxu0 0.0
    %133 = vmatpush1.msra.mxu0 0.0
    %134 = vmatprep.subr.mxu0 0.0
    %135 = vmatpush1.msra.mxu0 0.0
    %136 = vmatprep.subr.mxu0 0.0
    %137 = vmatpush1.msra.mxu0 0.0
    %138 = vmatprep.subr.mxu0 0.0
    %139 = vmatpush1.msra.mxu0 0.0
    %140 = vmatprep.mubr.f32.mxu0 0.0
    %141 = vmatmul.mubr.f32.gmra.mrb[0].mxu0 %v71
    %v142 = vpop.f32.mrb[0].mxu0
    %v143 = vadd.f32 %v68, %v142
    %v144 = vpop.f32.mrb[0].mxu0
    %145 = vmatprep.mubr.f32.mxu0 0.0
    %146 = vmatmul.mubr.f32.gmra.mrb[0].mxu0 %v74
    %v147 = vpop.f32.mrb[0].mxu0
    %v148 = vadd.f32 %v68, %v147
    %v149 = vpop.f32.mrb[0].mxu0
    %150 = vdwg.mxu0
    %v151 = vsel %vm69, %v143, 0.0
    %v152 = vsel %vm69, %v148, 0.0
    %v153 = vadd.f32 %v151, %v152
    %v154 = vrot.slane %v153, 4
    %v155 = vadd.f32 %v153, %v154
    %v156 = vrot.slane %v155, 2
    %v157 = vadd.f32 %v155, %v156
    %v158 = vrot.slane %v157, 1
    %v159 = vadd.f32 %v157, %v158
    %v160 = vrcp.pop 16.0
    %v161 = vmul.f32 %v159, %v160
    %v162 = vmul.f32 %v143, %v143
    %v163 = vmul.f32 %v148, %v148
    %v164 = vsel %vm69, %v162, 0.0
    %v165 = vsel %vm69, %v163, 0.0
    %v166 = vadd.f32 %v164, %v165
    %v167 = vrot.slane %v166, 4
    %v168 = vadd.f32 %v166, %v167
    %v169 = vrot.slane %v168, 2
    %v170 = vadd.f32 %v168, %v169
    %v171 = vrot.slane %v170, 1
    %v172 = vadd.f32 %v170, %v171
    %v173 = vmul.f32 %v172, %v160
    %v174 = vmul.f32 %v161, %v161
    %v175 = vsub.f32 %v173, %v174
    %v176 = vadd.f32 %v175, 1e-05
    %v177 = vrsqrt.pop %v176
    %v178 = vsub.f32 %v143, %v161
    %v179 = vsub.f32 %v148, %v161
    %v180 = vmul.f32 %v178, %v177
    %v181 = vmul.f32 %v179, %v177
    %v182 = vlaneseq
    %v183 = vshrl.u32 %v182, 7
    %v184 = vsub.s32 1, %v183
    %v185 = vrot.slane %v64, %v184
    %v186 = vmul.f32 %v180, %v185
    %v187 = vmul.f32 %v181, %v185
    %v188 = vlaneseq
    %v189 = vshrl.u32 %v188, 7
    %v190 = vsub.s32 2, %v189
    %v191 = vrot.slane %v64, %v190
    %v192 = vadd.f32 %v186, %v191
    %v193 = vadd.f32 %v187, %v191
    %vm194 = vcmp.ge.f32.partialorder %v192, 0.0
    %vm195 = vcmp.ge.f32.partialorder %v193, 0.0
    %v196 = vmul.f32 %v192, 0.01
    %v197 = vmul.f32 %v193, 0.01
    %v198 = vsel %vm194, %v192, %v196
    %v199 = vsel %vm195, %v193, %v197
    %v200 = vlaneseq
    %v201 = vshrl.u32 %v200, 7
    %v202 = vsub.s32 3, %v201
    %v203 = vrot.slane %v64, %v202
    %v205 = vsel %vm69, %v198, 0
    %v208 = vsel %vm69, %v199, 0
    %210 = vmatprep.subr.mxu0 0.0
    %211 = vmatpush1.msra.mxu0 %v60
    %212 = vmatprep.subr.mxu0 0.0
    %213 = vmatpush1.msra.mxu0 %v61
    %214 = vmatprep.subr.mxu0 0.0
    %215 = vmatpush1.msra.mxu0 %v62
    %216 = vmatprep.subr.mxu0 0.0
    %217 = vmatpush1.msra.mxu0 %v63
    %218 = vmatprep.subr.mxu0 0.0
    %219 = vmatpush1.msra.mxu0 0.0
    %220 = vmatprep.subr.mxu0 0.0
    %221 = vmatpush1.msra.mxu0 0.0
    %222 = vmatprep.subr.mxu0 0.0
    %223 = vmatpush1.msra.mxu0 0.0
    %224 = vmatprep.subr.mxu0 0.0
    %225 = vmatpush1.msra.mxu0 0.0
    %226 = vmatprep.subr.mxu0 0.0
    %227 = vmatpush1.msra.mxu0 0.0
    %228 = vmatprep.subr.mxu0 0.0
    %229 = vmatpush1.msra.mxu0 0.0
    %230 = vmatprep.subr.mxu0 0.0
    %231 = vmatpush1.msra.mxu0 0.0
    %232 = vmatprep.subr.mxu0 0.0
    %233 = vmatpush1.msra.mxu0 0.0
    %234 = vmatprep.subr.mxu0 0.0
    %235 = vmatpush1.msra.mxu0 0.0
    %236 = vmatprep.subr.mxu0 0.0
    %237 = vmatpush1.msra.mxu0 0.0
    %238 = vmatprep.subr.mxu0 0.0
    %239 = vmatpush1.msra.mxu0 0.0
    %240 = vmatprep.subr.mxu0 0.0
    %241 = vmatpush1.msra.mxu0 0.0
    %242 = vmatprep.subr.mxu0 0.0
    %243 = vmatpush1.msra.mxu0 0.0
    %244 = vmatprep.subr.mxu0 0.0
    %245 = vmatpush1.msra.mxu0 0.0
    %246 = vmatprep.subr.mxu0 0.0
    %247 = vmatpush1.msra.mxu0 0.0
    %248 = vmatprep.subr.mxu0 0.0
    %249 = vmatpush1.msra.mxu0 0.0
    %250 = vmatprep.subr.mxu0 0.0
    %251 = vmatpush1.msra.mxu0 0.0
    %252 = vmatprep.subr.mxu0 0.0
    %253 = vmatpush1.msra.mxu0 0.0
    %254 = vmatprep.subr.mxu0 0.0
    %255 = vmatpush1.msra.mxu0 0.0
    %256 = vmatprep.subr.mxu0 0.0
    %257 = vmatpush1.msra.mxu0 0.0
    %258 = vmatprep.subr.mxu0 0.0
    %259 = vmatpush1.msra.mxu0 0.0
    %260 = vmatprep.subr.mxu0 0.0
    %261 = vmatpush1.msra.mxu0 0.0
    %262 = vmatprep.subr.mxu0 0.0
    %263 = vmatpush1.msra.mxu0 0.0
    %264 = vmatprep.subr.mxu0 0.0
    %265 = vmatpush1.msra.mxu0 0.0
    %266 = vmatprep.subr.mxu0 0.0
    %267 = vmatpush1.msra.mxu0 0.0
    %268 = vmatprep.subr.mxu0 0.0
    %269 = vmatpush1.msra.mxu0 0.0
    %270 = vmatprep.subr.mxu0 0.0
    %271 = vmatpush1.msra.mxu0 0.0
    %272 = vmatprep.subr.mxu0 0.0
    %273 = vmatpush1.msra.mxu0 0.0
    %274 = vmatprep.mubr.f32.mxu0 0.0
    %275 = vmatmul.mubr.f32.gmra.mrb[0].mxu0 %v205
    %v276 = vpop.f32.mrb[0].mxu0
    %v277 = vadd.f32 %v203, %v276
    %v278 = vpop.f32.mrb[0].mxu0
    %279 = vmatprep.mubr.f32.mxu0 0.0
    %280 = vmatmul.mubr.f32.gmra.mrb[0].mxu0 %v208
    %v281 = vpop.f32.mrb[0].mxu0
    %v282 = vadd.f32 %v203, %v281
    %v283 = vpop.f32.mrb[0].mxu0
    %284 = vdwg.mxu0
    %v285 = vsel %vm69, %v277, 0.0
    %v286 = vsel %vm69, %v282, 0.0
    %v287 = vadd.f32 %v285, %v286
    %v288 = vrot.slane %v287, 4
    %v289 = vadd.f32 %v287, %v288
    %v290 = vrot.slane %v289, 2
    %v291 = vadd.f32 %v289, %v290
    %v292 = vrot.slane %v291, 1
    %v293 = vadd.f32 %v291, %v292
    %v294 = vmul.f32 %v293, %v160
    %v295 = vmul.f32 %v277, %v277
    %v296 = vmul.f32 %v282, %v282
    %v297 = vsel %vm69, %v295, 0.0
    %v298 = vsel %vm69, %v296, 0.0
    %v299 = vadd.f32 %v297, %v298
    %v300 = vrot.slane %v299, 4
    %v301 = vadd.f32 %v299, %v300
    %v302 = vrot.slane %v301, 2
    %v303 = vadd.f32 %v301, %v302
    %v304 = vrot.slane %v303, 1
    %v305 = vadd.f32 %v303, %v304
    %v306 = vmul.f32 %v305, %v160
    %v307 = vmul.f32 %v294, %v294
    %v308 = vsub.f32 %v306, %v307
    %v309 = vadd.f32 %v308, 1e-05
    %v310 = vrsqrt.pop %v309
    %v311 = vsub.f32 %v277, %v294
    %v312 = vsub.f32 %v282, %v294
    %v313 = vmul.f32 %v311, %v310
    %v314 = vmul.f32 %v312, %v310
    %v315 = vlaneseq
    %v316 = vshrl.u32 %v315, 7
    %v317 = vsub.s32 4, %v316
    %v318 = vrot.slane %v64, %v317
    %v319 = vmul.f32 %v313, %v318
    %v320 = vmul.f32 %v314, %v318
    %v321 = vlaneseq
    %v322 = vshrl.u32 %v321, 7
    %v323 = vsub.s32 5, %v322
    %v324 = vrot.slane %v64, %v323
    %v325 = vadd.f32 %v319, %v324
    %v326 = vadd.f32 %v320, %v324
    %vm327 = vcmp.ge.f32.partialorder %v325, 0.0
    %vm328 = vcmp.ge.f32.partialorder %v326, 0.0
    %v329 = vmul.f32 %v325, 0.01
    %v330 = vmul.f32 %v326, 0.01
    %v331 = vsel %vm327, %v325, %v329
    %v332 = vsel %vm328, %v326, %v330
    %333 = vst.msk [vmem:[#allocation8] sm:$0xff] %vm69, %v331
    %334 = vst.msk [vmem:[#allocation8 + $0x8] sm:$0xff] %vm69, %v332
    // Predicated region
    $region26: #{linear_block.1} parent=1 // pred_check
      _
    $region27: #{linear_block.1} parent=1 // pred_check_branch
      %336 = sbr.rel (0) target = $region29
    $region28: #{linear_block.1} parent=1 // pred_region
      %s338 = ssub.s32 256, 256
      %339 = vsyncadd [#allocation4], %s338
      %s340 = sshll.u32 [#allocation8], 4
      %s341 = int_to_ptr.vmem [resolvable:$true] %s340
      %346 = dma.vmem_to_hbm [thread:$0]  %s341, 256, %s3, [#allocation4], 128, 128, 8
    $region29: #{linear_block.1} parent=1 // pred_fallthru
      _
    // Predicated region
    $region30: #{linear_block.1} parent=1 // pred_check
      _
    $region31: #{linear_block.1} parent=1 // pred_check_branch
      %348 = sbr.rel (0) target = $region33
    $region32: #{linear_block.1} parent=1 // pred_region
      %349 = dma.done [#allocation4], 256
    $region33: #{linear_block.1} parent=1 // pred_fallthru
      _
    %350 = vsyncpa [#allocation3], 1
    %351 = vsyncpa [#allocation6], 1
    %352 = vsyncpa [#allocation4], 1

</llo_original>
